<compile_context>
chip_gen: v6e
topology: v6e:2x2x1
jax: 0.10.0
libtpu: 0.0.40
codegen_flags: <defaults>
</compile_context>

<pallas_src>
import jax
import jax.numpy as jnp
from jax.experimental import pallas as pl
from jax.experimental.pallas import tpu as pltpu

IN_DIM = 4      # CartPole observation dim
HIDDEN = 128
OUT_DIM = 2     # CartPole action dim
OUT_PAD = 128   # padded fc3 width (padding lives only in VMEM-resident params)
TM_MAX = 2048   # max batch-tile rows per grid step (VMEM accounting above)


def _round_up(a, b):
    return ((a + b - 1) // b) * b


# ----------------------------- kernels --------------------------------------

def _mlp(x_ref, w1_ref, b1_ref, w2_ref, b2_ref, w3_ref, b3_ref):
    """Shared MLP body -> (tm, OUT_PAD) f32 fc3 activations."""
    bf16 = jnp.bfloat16
    # fc1 + ReLU: K=4 contraction with f32 operands (avoids quantizing obs).
    h = jnp.dot(x_ref[...], w1_ref[...], preferred_element_type=jnp.float32)
    h = jnp.maximum(h + b1_ref[...], 0.0)
    # fc2 + ReLU: bf16 MXU operands, f32 accumulation.
    h = jnp.dot(h.astype(bf16), w2_ref[...], preferred_element_type=jnp.float32)
    h = jnp.maximum(h + b2_ref[...], 0.0)
    # fc3 (padded weight/bias columns are exactly zero -> slicing is exact).
    y = jnp.dot(h.astype(bf16), w3_ref[...], preferred_element_type=jnp.float32)
    return y + b3_ref[...]


def qnet_kernel(x_ref, w1_ref, b1_ref, w2_ref, b2_ref, w3_ref, b3_ref, o_ref):
    y = _mlp(x_ref, w1_ref, b1_ref, w2_ref, b2_ref, w3_ref, b3_ref)
    o_ref[...] = y[:, :OUT_DIM].astype(o_ref.dtype)


def qnet_action_kernel(x_ref, w1_ref, b1_ref, w2_ref, b2_ref, w3_ref, b3_ref,
                       q_ref, a_ref):
    y = _mlp(x_ref, w1_ref, b1_ref, w2_ref, b2_ref, w3_ref, b3_ref)
    q0 = y[:, 0:1]
    q1 = y[:, 1:2]
    q_ref[...] = y[:, :OUT_DIM].astype(q_ref.dtype)
    # Greedy action (ties -> 0, same as argmax). Epsilon coin stays host-side.
    a_ref[...] = jnp.where(q1 > q0, 1, 0).astype(jnp.int32)


# --------------------------- host-side wrappers ------------------------------

def prepare_params(params):
    """One-time parameter prep (hoisted out of the forward pass).

    Weights stored [in_features, out_features] (y = x @ W + b, identical to
    PyTorch's x @ W.T + b).  fc1 stays f32; fc2/fc3 cast to bf16 for the MXU;
    only fc3's weight/bias are zero-padded to OUT_PAD columns.
    """
    w1, b1, w2, b2, w3, b3 = params
    w3_p = jnp.zeros((HIDDEN, OUT_PAD), jnp.float32).at[:, :OUT_DIM].set(w3)
    b3_p = jnp.zeros((1, OUT_PAD), jnp.float32).at[:, :OUT_DIM].set(
        b3.reshape(1, -1))
    return (
        w1.astype(jnp.float32),
        b1.reshape(1, HIDDEN).astype(jnp.float32),
        w2.astype(jnp.bfloat16),
        b2.reshape(1, HIDDEN).astype(jnp.float32),
        w3_p.astype(jnp.bfloat16),
        b3_p,
    )


def _choose_tm(batch):
    if batch <= 256:
        # Single tile covering the whole batch: block dim == array dim is
        # always legal (no 8-row alignment requirement, no partial blocks).
        return batch
    # >= 2 grid steps so v7x megacore gets both TensorCores busy; tile capped
    # so per-step VMEM stays well inside the scoped default on all chips.
    return min(TM_MAX, _round_up(pl.cdiv(batch, 2), 8))


def _cost_estimate(batch, out_bytes):
    flops = 2 * batch * (IN_DIM * HIDDEN + HIDDEN * HIDDEN + HIDDEN * OUT_DIM)
    weight_bytes = (IN_DIM * HIDDEN * 4 + HIDDEN * 4 +
                    HIDDEN * HIDDEN * 2 + HIDDEN * 4 +
                    HIDDEN * OUT_PAD * 2 + OUT_PAD * 4)
    bytes_accessed = batch * IN_DIM * 4 + out_bytes + weight_bytes
    return pl.CostEstimate(flops=flops, transcendentals=0,
                           bytes_accessed=bytes_accessed)


_COMPILER_PARAMS = pltpu.CompilerParams(
    dimension_semantics=("parallel",),
    vmem_limit_bytes=32 * 1024 * 1024,
)


def _param_specs():
    const = lambda shape: pl.BlockSpec(shape, lambda i: (0, 0))
    return [
        const((IN_DIM, HIDDEN)),    # w1 (VMEM-resident across the grid)
        const((1, HIDDEN)),         # b1
        const((HIDDEN, HIDDEN)),    # w2
        const((1, HIDDEN)),         # b2
        const((HIDDEN, OUT_PAD)),   # w3 (zero-padded columns)
        const((1, OUT_PAD)),        # b3 (zero-padded columns)
    ]


def qnet_forward(x, prepared_params):
    """x: [batch, 4] f32. Returns [batch, 2] f32 Q-values."""
    batch = x.shape[0]
    tm = _choose_tm(batch)
    row_spec = lambda shape: pl.BlockSpec(shape, lambda i: (i, 0))

    return pl.pallas_call(
        qnet_kernel,
        out_shape=jax.ShapeDtypeStruct((batch, OUT_DIM), jnp.float32),
        grid=(pl.cdiv(batch, tm),),
        in_specs=[row_spec((tm, IN_DIM))] + _param_specs(),
        out_specs=row_spec((tm, OUT_DIM)),
        compiler_params=_COMPILER_PARAMS,
        cost_estimate=_cost_estimate(batch, batch * OUT_DIM * 4),
    )(x, *prepared_params)


def qnet_forward_and_action(x, prepared_params):
    """Fused inference path: returns (q [batch,2] f32, action [batch,1] i32)."""
    batch = x.shape[0]
    tm = _choose_tm(batch)
    row_spec = lambda shape: pl.BlockSpec(shape, lambda i: (i, 0))

    return pl.pallas_call(
        qnet_action_kernel,
        out_shape=(jax.ShapeDtypeStruct((batch, OUT_DIM), jnp.float32),
                   jax.ShapeDtypeStruct((batch, 1), jnp.int32)),
        grid=(pl.cdiv(batch, tm),),
        in_specs=[row_spec((tm, IN_DIM))] + _param_specs(),
        out_specs=(row_spec((tm, OUT_DIM)), row_spec((tm, 1))),
        compiler_params=_COMPILER_PARAMS,
        cost_estimate=_cost_estimate(batch, batch * (OUT_DIM * 4 + 4)),
    )(x, *prepared_params)


# --------------------------- init & references --------------------------------

def init_params(key):
    """PyTorch nn.Linear default init: U(-1/sqrt(fan_in), 1/sqrt(fan_in))."""
    ks = jax.random.split(key, 6)

    def linear(kw, kb, fan_in, fan_out):
        bound = 1.0 / jnp.sqrt(jnp.float32(fan_in))
        w = jax.random.uniform(kw, (fan_in, fan_out), jnp.float32, -bound, bound)
        b = jax.random.uniform(kb, (fan_out,), jnp.float32, -bound, bound)
        return w, b

    w1, b1 = linear(ks[0], ks[1], IN_DIM, HIDDEN)
    w2, b2 = linear(ks[2], ks[3], HIDDEN, HIDDEN)
    w3, b3 = linear(ks[4], ks[5], HIDDEN, OUT_DIM)
    return (w1, b1, w2, b2, w3, b3)


def qnet_reference_f32(x, params):
    w1, b1, w2, b2, w3, b3 = params
    h = jnp.maximum(x @ w1 + b1, 0.0)
    h = jnp.maximum(h @ w2 + b2, 0.0)
    return h @ w3 + b3


def qnet_reference_mixed(x, params):
    """Matches the kernel's recipe: f32 fc1, bf16-operand fc2/fc3, f32 accum."""
    w1, b1, w2, b2, w3, b3 = params
    bf = jnp.bfloat16
    h = jnp.maximum(jnp.dot(x, w1, preferred_element_type=jnp.float32) + b1, 0.0)
    h = jnp.dot(h.astype(bf), w2.astype(bf), preferred_element_type=jnp.float32)
    h = jnp.maximum(h + b2, 0.0)
    y = jnp.dot(h.astype(bf), w3.astype(bf), preferred_element_type=jnp.float32)
    return y + b3


# ------------------------------------ main ------------------------------------

if __name__ == "__main__":
    key = jax.random.PRNGKey(0)
    kp, kx = jax.random.split(key)
    params = init_params(kp)
    prepared = prepare_params(params)   # one-time: pad/reshape/cast weights

    # batch=2 primary; 33 = single ragged full-array tile; 600 = 2 grid steps
    # with a ragged (masked) last tile and both TCs active on v7x.
    for batch in (2, 33, 600):
        x = jax.random.normal(jax.random.fold_in(kx, batch),
                              (batch, IN_DIM), jnp.float32)
        out = jax.block_until_ready(qnet_forward(x, prepared))
        assert out.shape == (batch, OUT_DIM)

        ref_mixed = qnet_reference_mixed(x, params)
        ref_f32 = qnet_reference_f32(x, params)
        assert jnp.allclose(out, ref_mixed, atol=2e-2, rtol=2e-2), \
            f"batch={batch}: mismatch vs matched-precision reference"
        assert jnp.allclose(out, ref_f32, atol=3e-2, rtol=3e-2), \
            f"batch={batch}: mismatch vs f32 reference"

    # Fused greedy-action path (env-stepping inference, batch ~ 1-2).
    # TODO(synk): epsilon-greedy coin flip (Python random in get_action) stays host-side.
    for batch in (1, 2):
        x = jax.random.normal(jax.random.fold_in(kx, 100 + batch),
                              (batch, IN_DIM), jnp.float32)
        q, a = jax.block_until_ready(qnet_forward_and_action(x, prepared))
        assert q.shape == (batch, OUT_DIM) and a.shape == (batch, 1)
        assert jnp.array_equal(a[:, 0],
                               jnp.argmax(q, axis=-1).astype(jnp.int32)), \
            f"batch={batch}: fused action disagrees with argmax of fused Q"

    print("KERNEL_OK")
</pallas_src>

<mosaic_0001>
module attributes {stable_mosaic.version = 11 : i64} {
  func.func @qnet_kernel(%arg0: i32, %arg1: memref<2x4xf32, #tpu.memory_space<vmem>>, %arg2: memref<4x128xf32, #tpu.memory_space<vmem>>, %arg3: memref<1x128xf32, #tpu.memory_space<vmem>>, %arg4: memref<128x128xbf16, #tpu.memory_space<vmem>>, %arg5: memref<1x128xf32, #tpu.memory_space<vmem>>, %arg6: memref<128x128xbf16, #tpu.memory_space<vmem>>, %arg7: memref<1x128xf32, #tpu.memory_space<vmem>>, %arg8: memref<2x2xf32, #tpu.memory_space<vmem>>) attributes {dimension_semantics = [#tpu.dimension_semantics<parallel>], iteration_bounds = array<i64: 1>, scalar_prefetch = 0 : i64, scratch_operands = 0 : i64, tpu.core_type = #tpu.core_type<tc>, window_params = [{transform_indices = @transform_0, window_bounds = array<i64: 2, 4>}, {pipeline_mode = #tpu.pipeline_mode<synchronous>, transform_indices = @transform_1, window_bounds = array<i64: 4, 128>}, {pipeline_mode = #tpu.pipeline_mode<synchronous>, transform_indices = @transform_2, window_bounds = array<i64: 1, 128>}, {pipeline_mode = #tpu.pipeline_mode<synchronous>, transform_indices = @transform_3, window_bounds = array<i64: 128, 128>}, {pipeline_mode = #tpu.pipeline_mode<synchronous>, transform_indices = @transform_4, window_bounds = array<i64: 1, 128>}, {pipeline_mode = #tpu.pipeline_mode<synchronous>, transform_indices = @transform_5, window_bounds = array<i64: 128, 128>}, {pipeline_mode = #tpu.pipeline_mode<synchronous>, transform_indices = @transform_6, window_bounds = array<i64: 1, 128>}, {transform_indices = @transform_7, window_bounds = array<i64: 2, 2>}]} {
    %c0 = arith.constant 0 : index
    %c0_0 = arith.constant 0 : index
    %0 = vector.load %arg1[%c0, %c0_0] : memref<2x4xf32, #tpu.memory_space<vmem>>, vector<2x4xf32>
    %c0_1 = arith.constant 0 : index
    %c0_2 = arith.constant 0 : index
    %1 = vector.load %arg2[%c0_1, %c0_2] : memref<4x128xf32, #tpu.memory_space<vmem>>, vector<4x128xf32>
    %cst = arith.constant dense<0.000000e+00> : vector<2x128xf32>
    %2 = tpu.matmul %0, %1, %cst {dimension_numbers = #tpu.dot_dimension_numbers<[1], [0], [0], [1], [0, 0, 1, 1], [], []>} : vector<2x4xf32>, vector<4x128xf32>, vector<2x128xf32> -> vector<2x128xf32>
    %c0_3 = arith.constant 0 : index
    %c0_4 = arith.constant 0 : index
    %3 = vector.load %arg3[%c0_3, %c0_4] : memref<1x128xf32, #tpu.memory_space<vmem>>, vector<1x128xf32>
    %4 = vector.broadcast %3 : vector<1x128xf32> to vector<2x128xf32>
    %5 = arith.addf %2, %4 : vector<2x128xf32>
    %cst_5 = arith.constant 0.000000e+00 : f32
    %6 = vector.broadcast %cst_5 : f32 to vector<2x128xf32>
    %7 = arith.maximumf %5, %6 : vector<2x128xf32>
    %8 = arith.truncf %7 : vector<2x128xf32> to vector<2x128xbf16>
    %c0_6 = arith.constant 0 : index
    %c0_7 = arith.constant 0 : index
    %9 = vector.load %arg4[%c0_6, %c0_7] : memref<128x128xbf16, #tpu.memory_space<vmem>>, vector<128x128xbf16>
    %cst_8 = arith.constant dense<0.000000e+00> : vector<2x128xf32>
    %10 = tpu.matmul %8, %9, %cst_8 {dimension_numbers = #tpu.dot_dimension_numbers<[1], [0], [0], [1], [0, 0, 1, 1], [], []>} : vector<2x128xbf16>, vector<128x128xbf16>, vector<2x128xf32> -> vector<2x128xf32>
    %c0_9 = arith.constant 0 : index
    %c0_10 = arith.constant 0 : index
    %11 = vector.load %arg5[%c0_9, %c0_10] : memref<1x128xf32, #tpu.memory_space<vmem>>, vector<1x128xf32>
    %12 = vector.broadcast %11 : vector<1x128xf32> to vector<2x128xf32>
    %13 = arith.addf %10, %12 : vector<2x128xf32>
    %cst_11 = arith.constant 0.000000e+00 : f32
    %14 = vector.broadcast %cst_11 : f32 to vector<2x128xf32>
    %15 = arith.maximumf %13, %14 : vector<2x128xf32>
    %16 = arith.truncf %15 : vector<2x128xf32> to vector<2x128xbf16>
    %c0_12 = arith.constant 0 : index
    %c0_13 = arith.constant 0 : index
    %17 = vector.load %arg6[%c0_12, %c0_13] : memref<128x128xbf16, #tpu.memory_space<vmem>>, vector<128x128xbf16>
    %cst_14 = arith.constant dense<0.000000e+00> : vector<2x128xf32>
    %18 = tpu.matmul %16, %17, %cst_14 {dimension_numbers = #tpu.dot_dimension_numbers<[1], [0], [0], [1], [0, 0, 1, 1], [], []>} : vector<2x128xbf16>, vector<128x128xbf16>, vector<2x128xf32> -> vector<2x128xf32>
    %c0_15 = arith.constant 0 : index
    %c0_16 = arith.constant 0 : index
    %19 = vector.load %arg7[%c0_15, %c0_16] : memref<1x128xf32, #tpu.memory_space<vmem>>, vector<1x128xf32>
    %20 = vector.broadcast %19 : vector<1x128xf32> to vector<2x128xf32>
    %21 = arith.addf %18, %20 : vector<2x128xf32>
    %22 = vector.extract_strided_slice %21 {offsets = [0, 0], sizes = [2, 2], strides = [1, 1]} : vector<2x128xf32> to vector<2x2xf32>
    %c0_17 = arith.constant 0 : index
    %c0_18 = arith.constant 0 : index
    %23 = vector.load %arg8[%c0_17, %c0_18] : memref<2x2xf32, #tpu.memory_space<vmem>>, vector<2x2xf32>
    tpu.vector_store %arg8[%c0_17, %c0_18], %22 {strides = array<i32>} : memref<2x2xf32, #tpu.memory_space<vmem>>, vector<2x2xf32>,
    return
  }
  func.func @transform_0(%arg0: i32) -> (i32, i32) {
    %c0_i32 = arith.constant 0 : i32
    %c0_i32_0 = arith.constant 0 : i32
    return %arg0, %c0_i32 : i32, i32
  }
  func.func @transform_1(%arg0: i32) -> (i32, i32) {
    %c0_i32 = arith.constant 0 : i32
    %c0_i32_0 = arith.constant 0 : i32
    %c0_i32_1 = arith.constant 0 : i32
    return %c0_i32, %c0_i32_0 : i32, i32
  }
  func.func @transform_2(%arg0: i32) -> (i32, i32) {
    %c0_i32 = arith.constant 0 : i32
    %c0_i32_0 = arith.constant 0 : i32
    %c0_i32_1 = arith.constant 0 : i32
    return %c0_i32, %c0_i32_0 : i32, i32
  }
  func.func @transform_3(%arg0: i32) -> (i32, i32) {
    %c0_i32 = arith.constant 0 : i32
    %c0_i32_0 = arith.constant 0 : i32
    %c0_i32_1 = arith.constant 0 : i32
    return %c0_i32, %c0_i32_0 : i32, i32
  }
  func.func @transform_4(%arg0: i32) -> (i32, i32) {
    %c0_i32 = arith.constant 0 : i32
    %c0_i32_0 = arith.constant 0 : i32
    %c0_i32_1 = arith.constant 0 : i32
    return %c0_i32, %c0_i32_0 : i32, i32
  }
  func.func @transform_5(%arg0: i32) -> (i32, i32) {
    %c0_i32 = arith.constant 0 : i32
    %c0_i32_0 = arith.constant 0 : i32
    %c0_i32_1 = arith.constant 0 : i32
    return %c0_i32, %c0_i32_0 : i32, i32
  }
  func.func @transform_6(%arg0: i32) -> (i32, i32) {
    %c0_i32 = arith.constant 0 : i32
    %c0_i32_0 = arith.constant 0 : i32
    %c0_i32_1 = arith.constant 0 : i32
    return %c0_i32, %c0_i32_0 : i32, i32
  }
  func.func @transform_7(%arg0: i32) -> (i32, i32) {
    %c0_i32 = arith.constant 0 : i32
    %c0_i32_0 = arith.constant 0 : i32
    return %arg0, %c0_i32 : i32, i32
  }
}

</mosaic_0001>

<llo_original>
// kernel: tpu_custom_call.1
$region0: #{tpu_custom_call.1}
  #allocation0 [shape = 'u32[]', space=smem, size = 0x4, offset = 0x4, fixed_abs, tag = 'smem constant byte address 0x4 - core index']
  #allocation1 [shape = 'u32[144,128]{1,0:T(1,128)}', space=vmem, size = 0x12000, scoped, tag = 'internal scratch']
  %s0 = inlined_call_operand.hbm [shape: f32[2,4], index: 0, kind: input, shape index: {}]
  %s1 = inlined_call_operand.hbm [shape: f32[4,128], index: 1, kind: input, shape index: {}]
  %s2 = inlined_call_operand.vmem [shape: f32[1,128], index: 2, kind: input, shape index: {}]
  %s3 = inlined_call_operand.hbm [shape: bf16[128,128], index: 3, kind: input, shape index: {}]
  %s4 = inlined_call_operand.vmem [shape: f32[1,128], index: 4, kind: input, shape index: {}]
  %s5 = inlined_call_operand.hbm [shape: bf16[128,128], index: 5, kind: input, shape index: {}]
  %s6 = inlined_call_operand.vmem [shape: f32[1,128], index: 6, kind: input, shape index: {}]
  %s7 = inlined_call_operand.hbm [shape: f32[2,2], index: 7, kind: output, shape index: {}]
  %s8 = sld [smem:[#allocation0]]
  $region54: #{tpu_custom_call.1} parent=0
    _
  %s10 = ssub.s32 1, %s8
  %s11 = scalar_select 0, %s10, %s8
  $region1: #{tpu_custom_call.1} parent=0
    #allocation2 [shape = 'u8[1024]{0}', space=vmem, size = 0x400, scoped, tag = 'input window, operand 0, single buffered']
    #allocation3 [shape = 's32[1]{0}', space=sflag, size = 0x4, scoped, tag = 'scoped memory for tpu_custom_call.1']
    #allocation4 [shape = 's32[1]{0}', space=sflag, size = 0x4, scoped, tag = 'scoped memory for tpu_custom_call.1']
    #allocation5 [shape = 'u8[2048]{0}', space=vmem, size = 0x800, scoped, tag = 'input window, operand 1, single buffered']
    #allocation6 [shape = 's32[1]{0}', space=sflag, size = 0x4, scoped, tag = 'scoped memory for tpu_custom_call.1']
    #allocation7 [shape = 'u8[32768]{0}', space=vmem, size = 0x8000, scoped, tag = 'input window, operand 3, single buffered']
    #allocation8 [shape = 'u8[32768]{0}', space=vmem, size = 0x8000, scoped, tag = 'input window, operand 5, single buffered']
    #allocation9 [shape = 's32[1]{0}', space=sflag, size = 0x4, scoped, tag = 'scoped memory for tpu_custom_call.1']
    #allocation10 [shape = 'u8[1024]{0}', space=vmem, size = 0x400, scoped, tag = 'output window, operand 0, single buffered']
    %12 = vsyncpa [#allocation3], 0
    %13 = vsyncpa [#allocation6], 0
    %14 = vsyncpa [#allocation9], 0
    %15 = vsyncpa [#allocation4], 0
    // Predicated region
    $region2: #{tpu_custom_call.1} parent=1 // pred_check
      _
    $region3: #{tpu_custom_call.1} parent=1 // pred_check_branch
      %17 = sbr.rel (0) target = $region5
    $region4: #{tpu_custom_call.1} parent=1 // pred_region
      %s19 = ssub.s32 32, 32
      %20 = vsyncadd [#allocation3], %s19
      %s22 = sshll.u32 [#allocation2], 4
      %s23 = int_to_ptr.vmem [resolvable:$true] %s22
      %25 = dma.hbm_to_vmem [thread:$0]  %s0, 32, %s23, [#allocation3]
    $region5: #{tpu_custom_call.1} parent=1 // pred_fallthru
      _
    // Predicated region
    $region6: #{tpu_custom_call.1} parent=1 // pred_check
      _
    $region7: #{tpu_custom_call.1} parent=1 // pred_check_branch
      %27 = sbr.rel (0) target = $region9
    $region8: #{tpu_custom_call.1} parent=1 // pred_region
      %s29 = ssub.s32 64, 64
      %30 = vsyncadd [#allocation6], %s29
      %s32 = sshll.u32 [#allocation5], 4
      %s33 = int_to_ptr.vmem [resolvable:$true] %s32
      %35 = dma.hbm_to_vmem [thread:$0]  %s1, 64, %s33, [#allocation6]
    $region9: #{tpu_custom_call.1} parent=1 // pred_fallthru
      _
    // Predicated region
    $region10: #{tpu_custom_call.1} parent=1 // pred_check
      _
    $region11: #{tpu_custom_call.1} parent=1 // pred_check_branch
      %37 = sbr.rel (0) target = $region13
    $region12: #{tpu_custom_call.1} parent=1 // pred_region
      _
    $region13: #{tpu_custom_call.1} parent=1 // pred_fallthru
      _
    // Predicated region
    $region14: #{tpu_custom_call.1} parent=1 // pred_check
      _
    $region15: #{tpu_custom_call.1} parent=1 // pred_check_branch
      %39 = sbr.rel (0) target = $region17
    $region16: #{tpu_custom_call.1} parent=1 // pred_region
      %s41 = ssub.s32 1024, 1024
      %42 = vsyncadd [#allocation6], %s41
      %s43 = sshll.u32 [#allocation7], 4
      %s44 = int_to_ptr.vmem [resolvable:$true] %s43
      %49 = dma.hbm_to_vmem [thread:$0]  %s3, 1024, %s44, [#allocation6], 64, 64, 4
    $region17: #{tpu_custom_call.1} parent=1 // pred_fallthru
      _
    // Predicated region
    $region18: #{tpu_custom_call.1} parent=1 // pred_check
      _
    $region19: #{tpu_custom_call.1} parent=1 // pred_check_branch
      %51 = sbr.rel (0) target = $region21
    $region20: #{tpu_custom_call.1} parent=1 // pred_region
      _
    $region21: #{tpu_custom_call.1} parent=1 // pred_fallthru
      _
    // Predicated region
    $region22: #{tpu_custom_call.1} parent=1 // pred_check
      _
    $region23: #{tpu_custom_call.1} parent=1 // pred_check_branch
      %53 = sbr.rel (0) target = $region25
    $region24: #{tpu_custom_call.1} parent=1 // pred_region
      %s55 = ssub.s32 1024, 1024
      %56 = vsyncadd [#allocation9], %s55
      %s57 = sshll.u32 [#allocation8], 4
      %s58 = int_to_ptr.vmem [resolvable:$true] %s57
      %63 = dma.hbm_to_vmem [thread:$0]  %s5, 1024, %s58, [#allocation9], 64, 64, 4
    $region25: #{tpu_custom_call.1} parent=1 // pred_fallthru
      _
    // Predicated region
    $region26: #{tpu_custom_call.1} parent=1 // pred_check
      _
    $region27: #{tpu_custom_call.1} parent=1 // pred_check_branch
      %65 = sbr.rel (0) target = $region29
    $region28: #{tpu_custom_call.1} parent=1 // pred_region
      _
    $region29: #{tpu_custom_call.1} parent=1 // pred_fallthru
      _
    // Predicated region
    $region30: #{tpu_custom_call.1} parent=1 // pred_check
      _
    $region31: #{tpu_custom_call.1} parent=1 // pred_check_branch
      %67 = sbr.rel (0) target = $region33
    $region32: #{tpu_custom_call.1} parent=1 // pred_region
      %68 = dma.done [#allocation3], 32
    $region33: #{tpu_custom_call.1} parent=1 // pred_fallthru
      _
    // Predicated region
    $region34: #{tpu_custom_call.1} parent=1 // pred_check
      _
    $region35: #{tpu_custom_call.1} parent=1 // pred_check_branch
      %70 = sbr.rel (0) target = $region37
    $region36: #{tpu_custom_call.1} parent=1 // pred_region
      %71 = dma.done [#allocation6], 64
    $region37: #{tpu_custom_call.1} parent=1 // pred_fallthru
      _
    // Predicated region
    $region38: #{tpu_custom_call.1} parent=1 // pred_check
      _
    $region39: #{tpu_custom_call.1} parent=1 // pred_check_branch
      %73 = sbr.rel (0) target = $region41
    $region40: #{tpu_custom_call.1} parent=1 // pred_region
      %74 = dma.done [#allocation6], 1024
    $region41: #{tpu_custom_call.1} parent=1 // pred_fallthru
      _
    // Predicated region
    $region42: #{tpu_custom_call.1} parent=1 // pred_check
      _
    $region43: #{tpu_custom_call.1} parent=1 // pred_check_branch
      %76 = sbr.rel (0) target = $region45
    $region44: #{tpu_custom_call.1} parent=1 // pred_region
      %77 = dma.done [#allocation9], 1024
    $region45: #{tpu_custom_call.1} parent=1 // pred_fallthru
      _
    %v79 = vld [vmem:[#allocation2] sm:$0x3]
    %v80 = vld [vmem:[#allocation5] sm:$0xf]
    %v81 = vld [vmem:[%s2] sm:$0x1]
    %v83 = vlaneseq
    %v84 = vshrl.u32 %v83, 7
    %v85 = vsub.s32 0, %v84
    %v86 = vrot.slane %v81, %v85
    %vm88 = vcmask 31744
    %v90 = vsel %vm88, %v79, 0
    %vm92 = vcmask 1043456
    %v94 = vsel %vm92, %v80, 0
    %96 = vmatprep.subr.mxu0 0.0
    %97 = vmatpush1.msra.mxu0 0.0
    %98 = vmatprep.subr.mxu0 0.0
    %99 = vmatpush1.msra.mxu0 0.0
    %100 = vmatprep.subr.mxu0 0.0
    %101 = vmatpush1.msra.mxu0 0.0
    %102 = vmatprep.subr.mxu0 0.0
    %103 = vmatpush1.msra.mxu0 0.0
    %104 = vmatprep.subr.mxu0 0.0
    %105 = vmatpush1.msra.mxu0 0.0
    %106 = vmatprep.subr.mxu0 0.0
    %107 = vmatpush1.msra.mxu0 0.0
    %108 = vmatprep.subr.mxu0 0.0
    %109 = vmatpush1.msra.mxu0 0.0
    %110 = vmatprep.subr.mxu0 0.0
    %111 = vmatpush1.msra.mxu0 0.0
    %112 = vmatprep.subr.mxu0 0.0
    %113 = vmatpush1.msra.mxu0 0.0
    %114 = vmatprep.subr.mxu0 0.0
    %115 = vmatpush1.msra.mxu0 0.0
    %116 = vmatprep.subr.mxu0 0.0
    %117 = vmatpush1.msra.mxu0 0.0
    %118 = vmatprep.subr.mxu0 0.0
    %119 = vmatpush1.msra.mxu0 0.0
    %120 = vmatprep.subr.mxu0 0.0
    %121 = vmatpush1.msra.mxu0 0.0
    %122 = vmatprep.subr.mxu0 0.0
    %123 = vmatpush1.msra.mxu0 0.0
    %124 = vmatprep.subr.mxu0 0.0
    %125 = vmatpush1.msra.mxu0 0.0
    %126 = vmatprep.subr.mxu0 0.0
    %127 = vmatpush1.msra.mxu0 %v94
    %128 = vmatprep.subr.mxu0 0.0
    %129 = vmatpush2.msra.mxu0 0.0
    %130 = vmatprep.subr.mxu0 0.0
    %131 = vmatpush2.msra.mxu0 0.0
    %132 = vmatprep.subr.mxu0 0.0
    %133 = vmatpush2.msra.mxu0 0.0
    %134 = vmatprep.subr.mxu0 0.0
    %135 = vmatpush2.msra.mxu0 0.0
    %136 = vmatprep.subr.mxu0 0.0
    %137 = vmatpush2.msra.mxu0 0.0
    %138 = vmatprep.subr.mxu0 0.0
    %139 = vmatpush2.msra.mxu0 0.0
    %140 = vmatprep.subr.mxu0 0.0
    %141 = vmatpush2.msra.mxu0 0.0
    %142 = vmatprep.subr.mxu0 0.0
    %143 = vmatpush2.msra.mxu0 0.0
    %144 = vmatprep.subr.mxu0 0.0
    %145 = vmatpush2.msra.mxu0 0.0
    %146 = vmatprep.subr.mxu0 0.0
    %147 = vmatpush2.msra.mxu0 0.0
    %148 = vmatprep.subr.mxu0 0.0
    %149 = vmatpush2.msra.mxu0 0.0
    %150 = vmatprep.subr.mxu0 0.0
    %151 = vmatpush2.msra.mxu0 0.0
    %152 = vmatprep.subr.mxu0 0.0
    %153 = vmatpush2.msra.mxu0 0.0
    %154 = vmatprep.subr.mxu0 0.0
    %155 = vmatpush2.msra.mxu0 0.0
    %156 = vmatprep.subr.mxu0 0.0
    %157 = vmatpush2.msra.mxu0 0.0
    %158 = vmatprep.subr.mxu0 0.0
    %159 = vmatpush2.msra.mxu0 0.0
    %160 = vmatprep.mubr.f32.mxu0 0.0
    %161 = vmatmul.mubr.f32.gmra.mxu0 %v90
    %v162 = vpop.f32.mrf.mxu0
    %v163 = vadd.f32 %v86, %v162
    %v164 = vpop.f32.mrf.mxu0
    %165 = vdwg.mxu0
    %v166 = vmax.f32 %v163, 0.0
    %v167 = vpack.c.bf16 %v166, %v166
    %v168 = vld [vmem:[#allocation7] sm:$0xf]
    %v169 = vld [vmem:[#allocation7 + $0x4] sm:$0xf]
    %v170 = vld [vmem:[#allocation7 + $0x8] sm:$0xf]
    %v171 = vld [vmem:[#allocation7 + $0xc] sm:$0xf]
    %v172 = vld [vmem:[#allocation7 + $0x10] sm:$0xf]
    %v173 = vld [vmem:[#allocation7 + $0x14] sm:$0xf]
    %v174 = vld [vmem:[#allocation7 + $0x18] sm:$0xf]
    %v175 = vld [vmem:[#allocation7 + $0x1c] sm:$0xf]
    %v176 = vld [vmem:[#allocation7 + $0x20] sm:$0xf]
    %v177 = vld [vmem:[#allocation7 + $0x24] sm:$0xf]
    %v178 = vld [vmem:[#allocation7 + $0x28] sm:$0xf]
    %v179 = vld [vmem:[#allocation7 + $0x2c] sm:$0xf]
    %v180 = vld [vmem:[#allocation7 + $0x30] sm:$0xf]
    %v181 = vld [vmem:[#allocation7 + $0x34] sm:$0xf]
    %v182 = vld [vmem:[#allocation7 + $0x38] sm:$0xf]
    %v183 = vld [vmem:[#allocation7 + $0x3c] sm:$0xf]
    %v184 = vld [vmem:[%s4] sm:$0x1]
    %v186 = vlaneseq
    %v187 = vshrl.u32 %v186, 7
    %v188 = vsub.s32 0, %v187
    %v189 = vrot.slane %v184, %v188
    %v207 = vunpack.c.l.b16 %v168
    %v208 = vunpack.c.l.b16 %v169
    %v209 = vunpack.c.l.b16 %v170
    %v210 = vunpack.c.l.b16 %v171
    %v211 = vunpack.c.l.b16 %v172
    %v212 = vunpack.c.l.b16 %v173
    %v213 = vunpack.c.l.b16 %v174
    %v214 = vunpack.c.l.b16 %v175
    %v215 = vunpack.c.l.b16 %v176
    %v216 = vunpack.c.l.b16 %v177
    %v217 = vunpack.c.l.b16 %v178
    %v218 = vunpack.c.l.b16 %v179
    %v219 = vunpack.c.l.b16 %v180
    %v220 = vunpack.c.l.b16 %v181
    %v221 = vunpack.c.l.b16 %v182
    %v222 = vunpack.c.l.b16 %v183
    %v223 = vpack.c.b16 %v208, %v207
    %v224 = vpack.c.b16 %v210, %v209
    %v225 = vpack.c.b16 %v212, %v211
    %v226 = vpack.c.b16 %v214, %v213
    %v227 = vpack.c.b16 %v216, %v215
    %v228 = vpack.c.b16 %v218, %v217
    %v229 = vpack.c.b16 %v220, %v219
    %v230 = vpack.c.b16 %v222, %v221
    %239 = vmatprep.subr.bf16.mxu0 0
    %240 = vmatpush1.bf16.msra.mxu0 %v230
    %241 = vmatprep.subr.bf16.mxu0 0
    %242 = vmatpush1.bf16.msra.mxu0 %v229
    %243 = vmatprep.subr.bf16.mxu0 0
    %244 = vmatpush1.bf16.msra.mxu0 %v228
    %245 = vmatprep.subr.bf16.mxu0 0
    %246 = vmatpush1.bf16.msra.mxu0 %v227
    %247 = vmatprep.subr.bf16.mxu0 0
    %248 = vmatpush1.bf16.msra.mxu0 %v226
    %249 = vmatprep.subr.bf16.mxu0 0
    %250 = vmatpush1.bf16.msra.mxu0 %v225
    %251 = vmatprep.subr.bf16.mxu0 0
    %252 = vmatpush1.bf16.msra.mxu0 %v224
    %253 = vmatprep.subr.bf16.mxu0 0
    %254 = vmatpush1.bf16.msra.mxu0 %v223
    %255 = vmatprep.subr.bf16.mxu0 0
    %256 = vmatpush2.bf16.msra.mxu0 0
    %257 = vmatprep.subr.bf16.mxu0 0
    %258 = vmatpush2.bf16.msra.mxu0 0
    %259 = vmatprep.subr.bf16.mxu0 0
    %260 = vmatpush2.bf16.msra.mxu0 0
    %261 = vmatprep.subr.bf16.mxu0 0
    %262 = vmatpush2.bf16.msra.mxu0 0
    %263 = vmatprep.subr.bf16.mxu0 0
    %264 = vmatpush2.bf16.msra.mxu0 0
    %265 = vmatprep.subr.bf16.mxu0 0
    %266 = vmatpush2.bf16.msra.mxu0 0
    %267 = vmatprep.subr.bf16.mxu0 0
    %268 = vmatpush2.bf16.msra.mxu0 0
    %269 = vmatprep.subr.bf16.mxu0 0
    %270 = vmatpush2.bf16.msra.mxu0 0
    %271 = vmatprep.mubr.bf16.mxu0 0
    %272 = vmatmul.mubr.bf16.gmra.mxu0 %v167
    %v273 = vpop.f32.mrf.mxu0
    %v274 = vadd.f32 %v189, %v273
    %v275 = vpop.f32.mrf.mxu0
    %v276 = vpop.f32.mrf.mxu0
    %v277 = vpop.f32.mrf.mxu0
    %278 = vdwg.mxu0
    %v279 = vmax.f32 %v274, 0.0
    %v280 = vpack.c.bf16 %v279, %v279
    %v281 = vld [vmem:[#allocation8] sm:$0xf]
    %v282 = vld [vmem:[#allocation8 + $0x4] sm:$0xf]
    %v283 = vld [vmem:[#allocation8 + $0x8] sm:$0xf]
    %v284 = vld [vmem:[#allocation8 + $0xc] sm:$0xf]
    %v285 = vld [vmem:[#allocation8 + $0x10] sm:$0xf]
    %v286 = vld [vmem:[#allocation8 + $0x14] sm:$0xf]
    %v287 = vld [vmem:[#allocation8 + $0x18] sm:$0xf]
    %v288 = vld [vmem:[#allocation8 + $0x1c] sm:$0xf]
    %v289 = vld [vmem:[#allocation8 + $0x20] sm:$0xf]
    %v290 = vld [vmem:[#allocation8 + $0x24] sm:$0xf]
    %v291 = vld [vmem:[#allocation8 + $0x28] sm:$0xf]
    %v292 = vld [vmem:[#allocation8 + $0x2c] sm:$0xf]
    %v293 = vld [vmem:[#allocation8 + $0x30] sm:$0xf]
    %v294 = vld [vmem:[#allocation8 + $0x34] sm:$0xf]
    %v295 = vld [vmem:[#allocation8 + $0x38] sm:$0xf]
    %v296 = vld [vmem:[#allocation8 + $0x3c] sm:$0xf]
    %v297 = vld [vmem:[%s6] sm:$0x1]
    %v299 = vlaneseq
    %v300 = vshrl.u32 %v299, 7
    %v301 = vsub.s32 0, %v300
    %v302 = vrot.slane %v297, %v301
    %v320 = vunpack.c.l.b16 %v281
    %v321 = vunpack.c.l.b16 %v282
    %v322 = vunpack.c.l.b16 %v283
    %v323 = vunpack.c.l.b16 %v284
    %v324 = vunpack.c.l.b16 %v285
    %v325 = vunpack.c.l.b16 %v286
    %v326 = vunpack.c.l.b16 %v287
    %v327 = vunpack.c.l.b16 %v288
    %v328 = vunpack.c.l.b16 %v289
    %v329 = vunpack.c.l.b16 %v290
    %v330 = vunpack.c.l.b16 %v291
    %v331 = vunpack.c.l.b16 %v292
    %v332 = vunpack.c.l.b16 %v293
    %v333 = vunpack.c.l.b16 %v294
    %v334 = vunpack.c.l.b16 %v295
    %v335 = vunpack.c.l.b16 %v296
    %v336 = vpack.c.b16 %v321, %v320
    %v337 = vpack.c.b16 %v323, %v322
    %v338 = vpack.c.b16 %v325, %v324
    %v339 = vpack.c.b16 %v327, %v326
    %v340 = vpack.c.b16 %v329, %v328
    %v341 = vpack.c.b16 %v331, %v330
    %v342 = vpack.c.b16 %v333, %v332
    %v343 = vpack.c.b16 %v335, %v334
    %352 = vmatprep.subr.bf16.mxu0 0
    %353 = vmatpush1.bf16.msra.mxu0 %v343
    %354 = vmatprep.subr.bf16.mxu0 0
    %355 = vmatpush1.bf16.msra.mxu0 %v342
    %356 = vmatprep.subr.bf16.mxu0 0
    %357 = vmatpush1.bf16.msra.mxu0 %v341
    %358 = vmatprep.subr.bf16.mxu0 0
    %359 = vmatpush1.bf16.msra.mxu0 %v340
    %360 = vmatprep.subr.bf16.mxu0 0
    %361 = vmatpush1.bf16.msra.mxu0 %v339
    %362 = vmatprep.subr.bf16.mxu0 0
    %363 = vmatpush1.bf16.msra.mxu0 %v338
    %364 = vmatprep.subr.bf16.mxu0 0
    %365 = vmatpush1.bf16.msra.mxu0 %v337
    %366 = vmatprep.subr.bf16.mxu0 0
    %367 = vmatpush1.bf16.msra.mxu0 %v336
    %368 = vmatprep.subr.bf16.mxu0 0
    %369 = vmatpush2.bf16.msra.mxu0 0
    %370 = vmatprep.subr.bf16.mxu0 0
    %371 = vmatpush2.bf16.msra.mxu0 0
    %372 = vmatprep.subr.bf16.mxu0 0
    %373 = vmatpush2.bf16.msra.mxu0 0
    %374 = vmatprep.subr.bf16.mxu0 0
    %375 = vmatpush2.bf16.msra.mxu0 0
    %376 = vmatprep.subr.bf16.mxu0 0
    %377 = vmatpush2.bf16.msra.mxu0 0
    %378 = vmatprep.subr.bf16.mxu0 0
    %379 = vmatpush2.bf16.msra.mxu0 0
    %380 = vmatprep.subr.bf16.mxu0 0
    %381 = vmatpush2.bf16.msra.mxu0 0
    %382 = vmatprep.subr.bf16.mxu0 0
    %383 = vmatpush2.bf16.msra.mxu0 0
    %384 = vmatprep.mubr.bf16.mxu0 0
    %385 = vmatmul.mubr.bf16.gmra.mxu0 %v280
    %v386 = vpop.f32.mrf.mxu0
    %v387 = vadd.f32 %v302, %v386
    %v388 = vpop.f32.mrf.mxu0
    %v389 = vpop.f32.mrf.mxu0
    %v390 = vpop.f32.mrf.mxu0
    %391 = vdwg.mxu0
    %vm392 = vcmask 9216
    %393 = vst.msk [vmem:[#allocation10] sm:$0x3] %vm392, %v387
    // Predicated region
    $region46: #{tpu_custom_call.1} parent=1 // pred_check
      _
    $region47: #{tpu_custom_call.1} parent=1 // pred_check_branch
      %395 = sbr.rel (0) target = $region49
    $region48: #{tpu_custom_call.1} parent=1 // pred_region
      %s397 = ssub.s32 32, 32
      %398 = vsyncadd [#allocation4], %s397
      %s400 = sshll.u32 [#allocation10], 4
      %s401 = int_to_ptr.vmem [resolvable:$true] %s400
      %403 = dma.vmem_to_hbm [thread:$0]  %s401, 32, %s7, [#allocation4]
    $region49: #{tpu_custom_call.1} parent=1 // pred_fallthru
      _
    // Predicated region
    $region50: #{tpu_custom_call.1} parent=1 // pred_check
      _
    $region51: #{tpu_custom_call.1} parent=1 // pred_check_branch
      %405 = sbr.rel (0) target = $region53
    $region52: #{tpu_custom_call.1} parent=1 // pred_region
      %406 = dma.done [#allocation4], 32
    $region53: #{tpu_custom_call.1} parent=1 // pred_fallthru
      _
    %407 = vsyncpa [#allocation3], 1
    %408 = vsyncpa [#allocation6], 1
    %409 = vsyncpa [#allocation9], 1
    %410 = vsyncpa [#allocation4], 1

</llo_original>
